<compile_context>
chip_gen: v5e
topology: v5e:2x2
jax: 0.10.0
libtpu: 0.0.40
codegen_flags: <defaults>
</compile_context>

<pallas_src>
import functools

import jax
import jax.numpy as jnp
from jax.experimental import pallas as pl
from jax.experimental.pallas import tpu as pltpu


_VMEM_LIMIT = 48 * 1024 * 1024       # scoped cap: < v7x 64 MiB physical, << v5e/v6e 128 MiB
_TILE_BUDGET = 20 * 1024 * 1024      # budget for double-buffered per-step tiles in kernel 1
_EPILOGUE_BUDGET = 24 * 1024 * 1024  # per-sample block budget for the direct-NCHW epilogue


# ------------------------------- kernels ------------------------------------


def _matmul_stats_kernel(p_ref, w_ref, y_ref, ssum_ref, ssq_ref):
    """y = W @ patches (MXU, bf16 in / f32 acc) + fused lane-parallel channel stats.

    p_ref:    (1, K_p, tm)   bf16  im2col patch tile (spatial on the lane axis)
    w_ref:    (Cout, K_p)    bf16  resident weight
    y_ref:    (1, Cout, tm)  bf16  conv output tile (per-sample NCHW layout, lane-dense)
    ssum_ref: (Cout, 128)    f32   resident lane-parallel accumulator (sum)
    ssq_ref:  (Cout, 128)    f32   resident lane-parallel accumulator (sum of squares)
    """
    @pl.when((pl.program_id(0) == 0) & (pl.program_id(1) == 0))
    def _():
        ssum_ref[...] = jnp.zeros_like(ssum_ref)
        ssq_ref[...] = jnp.zeros_like(ssq_ref)

    y = jnp.dot(w_ref[...], p_ref[0], preferred_element_type=jnp.float32)  # (Cout, tm) f32
    y_ref[0] = y.astype(y_ref.dtype)   # bf16 intermediate (stats taken from f32 below)

    # Lane-parallel stats: pure VPU adds over 128-wide lane groups; the single cross-lane
    # reduction happens once in the (tiny) XLA glue, not once per grid step on the XLU.
    s = ssum_ref[...]
    q = ssq_ref[...]
    tm = y.shape[-1]
    for j in range(tm // 128):         # static, unrolled
        blk = y[:, j * 128:(j + 1) * 128]
        s = s + blk
        q = q + blk * blk
    ssum_ref[...] = s
    ssq_ref[...] = q


def _bn_relu_kernel(y_ref, scale_ref, shift_ref, o_ref):
    """Normalize + ReLU one block, writing directly into the NCHW output.

    y_ref: (1, Cout, T_in) bf16   scale/shift: (Cout, 1) f32   o_ref: (1, Cout, T_out) f32
    T_out <= T_in (in-kernel depad of the lane padding when T_in = OHOW_p > OH*OW).
    """
    t_out = o_ref.shape[-1]
    y = y_ref[0][:, :t_out].astype(jnp.float32)
    o_ref[0] = jnp.maximum(y * scale_ref[...] + shift_ref[...], 0.0)


# ------------------------------- wrapper ------------------------------------


def _round_up(x, m):
    return (x + m - 1) // m * m


def _pick_tile(ohow_p, k_p, cout, tm_req):
    """Largest multiple-of-128 divisor of ohow_p bounded by tm_req and the VMEM budget."""
    # per-step bytes ~ 2 bufs * 2 B * (K_p + Cout) * tm  (bf16 patch tile + bf16 y tile)
    cap = _TILE_BUDGET // (4 * (k_p + cout))
    cap = max(128, min(tm_req, cap) // 128 * 128)
    q = ohow_p // 128
    for d in range(q, 0, -1):
        if q % d == 0 and d * 128 <= cap:
            return d * 128
    return 128


@functools.partial(jax.jit, static_argnames=("stride", "padding", "eps", "tm"))
def conv_block_forward(x, w, b, gamma, beta, *, stride=1, padding=1, eps=1e-5, tm=2048):
    """conv_block forward: Conv2d -> BatchNorm2d (batch stats) -> ReLU.

    x:     (N, Cin, H, W)      f32 (NCHW, like PyTorch)
    w:     (Cout, Cin, KH, KW) f32 (PyTorch conv weight layout)
    b:     (Cout,)             f32 (unused: a per-channel bias cancels exactly under
                                    training-mode BatchNorm)
    gamma: (Cout,)  BN weight
    beta:  (Cout,)  BN bias
    Returns (N, Cout, OH, OW) f32.
    """
    del b  # cancels: (y + b) - mean(y + b) == y - mean(y)

    N, Cin, H, W = x.shape
    Cout, _, KH, KW = w.shape
    OH = (H + 2 * padding - KH) // stride + 1
    OW = (W + 2 * padding - KW) // stride + 1
    OHOW = OH * OW
    OHOW_p = _round_up(OHOW, 128)        # per-sample spatial padding (lane-dense tiles)
    M = N * OHOW                         # true element count per channel (for the stats)
    K = Cin * KH * KW
    K_p = _round_up(K, 16)               # sublane / bf16-packing friendly

    tm = _pick_tile(OHOW_p, K_p, Cout, max(128, tm))
    n_blocks = OHOW_p // tm

    # ---- im2col (plain-JAX glue): strided slices + stack + reshape only ----
    # K-order is (kh, kw, cin); the (tiny) weight is permuted to match, so the 9x-inflated
    # patch tensor is never transposed again in XLA.
    xb = x.astype(jnp.bfloat16)                      # bf16 MXU inputs, f32 accumulation
    xp = jnp.pad(xb, ((0, 0), (0, 0), (padding, padding), (padding, padding)))
    cols = []
    for kh in range(KH):
        for kw in range(KW):
            s = xp[:, :, kh:kh + stride * OH:stride, kw:kw + stride * OW:stride]
            s = s.reshape(N, Cin, OHOW)
            if OHOW_p != OHOW:
                s = jnp.pad(s, ((0, 0), (0, 0), (0, OHOW_p - OHOW)))
            cols.append(s)                           # (N, Cin, OHOW_p) each
    patches = jnp.stack(cols, axis=1).reshape(N, KH * KW * Cin, OHOW_p)
    if K_p != K:
        patches = jnp.pad(patches, ((0, 0), (0, K_p - K), (0, 0)))   # (N, K_p, OHOW_p) bf16

    w_t = jnp.transpose(w, (0, 2, 3, 1)).reshape(Cout, K)            # (kh, kw, cin) K-order
    if K_p != K:
        w_t = jnp.pad(w_t, ((0, 0), (0, K_p - K)))
    w_t = w_t.astype(jnp.bfloat16)                                   # (Cout, K_p)

    # ---- kernel 1: conv matmul with fused lane-parallel per-channel stats ----
    y, s_sum, s_sq = pl.pallas_call(
        _matmul_stats_kernel,
        out_shape=(
            jax.ShapeDtypeStruct((N, Cout, OHOW_p), jnp.bfloat16),   # bf16 intermediate
            jax.ShapeDtypeStruct((Cout, 128), jnp.float32),
            jax.ShapeDtypeStruct((Cout, 128), jnp.float32),
        ),
        grid_spec=pltpu.PrefetchScalarGridSpec(
            num_scalar_prefetch=0,
            grid=(N, n_blocks),
            in_specs=[
                pl.BlockSpec((1, K_p, tm), lambda n, j: (n, 0, j)),
                pl.BlockSpec((Cout, K_p), lambda n, j: (0, 0)),      # resident weight
            ],
            out_specs=[
                pl.BlockSpec((1, Cout, tm), lambda n, j: (n, 0, j)),
                pl.BlockSpec((Cout, 128), lambda n, j: (0, 0)),      # resident accumulator
                pl.BlockSpec((Cout, 128), lambda n, j: (0, 0)),      # resident accumulator
            ],
        ),
        compiler_params=pltpu.CompilerParams(
            # Both axes carry the resident stats accumulators -> "arbitrary".
            # TODO(synk): on v7x add a leading core axis with pltpu.CORE_PARALLEL and
            # per-core partial stats to use both TensorCores.
            dimension_semantics=("arbitrary", "arbitrary"),
            vmem_limit_bytes=_VMEM_LIMIT,
        ),
    )(patches, w_t)

    # ---- tiny glue: batch statistics -> affine scale/shift (all f32) ----
    ssum = jnp.sum(s_sum, axis=1)                    # (Cout,) single cross-lane reduction
    ssq = jnp.sum(s_sq, axis=1)                      # (Cout,)
    mean = ssum / M                                  # padded lanes are exactly zero (no bias)
    # TODO(synk): E[y^2]-mean^2 in one f32 pass can cancel when |mean| >> std; a shifted /
    # Welford-style accumulation would be more robust for extreme layers.
    var = jnp.maximum(ssq / M - mean * mean, 0.0)
    inv_std = jax.lax.rsqrt(var + eps)
    scale = (gamma * inv_std).reshape(Cout, 1)
    shift = (beta - mean * gamma * inv_std).reshape(Cout, 1)

    def ew_params(ndims):
        return pltpu.CompilerParams(dimension_semantics=("parallel",) * ndims,
                                    vmem_limit_bytes=_VMEM_LIMIT)

    # ---- kernel 2: normalize + ReLU, writing the NCHW output directly ----
    per_sample_bytes = 2 * Cout * (OHOW_p * 2 + OHOW * 4)   # double-buffered in+out blocks
    if per_sample_bytes <= _EPILOGUE_BUDGET:
        # Default path for GoogLeNet-sized layers: one full sample per grid step, lane
        # padding removed inside the kernel -> no XLA transpose or depad pass at all.
        out3 = pl.pallas_call(
            _bn_relu_kernel,
            out_shape=jax.ShapeDtypeStruct((N, Cout, OHOW), jnp.float32),
            grid_spec=pltpu.PrefetchScalarGridSpec(
                num_scalar_prefetch=0,
                grid=(N,),
                in_specs=[
                    pl.BlockSpec((1, Cout, OHOW_p), lambda n: (n, 0, 0)),
                    pl.BlockSpec((Cout, 1), lambda n: (0, 0)),
                    pl.BlockSpec((Cout, 1), lambda n: (0, 0)),
                ],
                out_specs=pl.BlockSpec((1, Cout, OHOW), lambda n: (n, 0, 0)),
            ),
            compiler_params=ew_params(1),
        )(y, scale, shift)
        return out3.reshape(N, Cout, OH, OW)

    # Fallback for very large per-sample slabs: tile the spatial axis, depad in XLA.
    out_p = pl.pallas_call(
        _bn_relu_kernel,
        out_shape=jax.ShapeDtypeStruct((N, Cout, OHOW_p), jnp.float32),
        grid_spec=pltpu.PrefetchScalarGridSpec(
            num_scalar_prefetch=0,
            grid=(N, n_blocks),
            in_specs=[
                pl.BlockSpec((1, Cout, tm), lambda n, j: (n, 0, j)),
                pl.BlockSpec((Cout, 1), lambda n, j: (0, 0)),
                pl.BlockSpec((Cout, 1), lambda n, j: (0, 0)),
            ],
            out_specs=pl.BlockSpec((1, Cout, tm), lambda n, j: (n, 0, j)),
        ),
        compiler_params=ew_params(2),
    )(y, scale, shift)
    return out_p[:, :, :OHOW].reshape(N, Cout, OH, OW)


# ------------------------------ reference -----------------------------------


def conv_block_reference(x, w, b, gamma, beta, *, stride=1, padding=1, eps=1e-5):
    y = jax.lax.conv_general_dilated(
        x, w, window_strides=(stride, stride),
        padding=((padding, padding), (padding, padding)),
        dimension_numbers=("NCHW", "OIHW", "NCHW"),
    )
    y = y + b[None, :, None, None]
    mean = jnp.mean(y, axis=(0, 2, 3), keepdims=True)
    var = jnp.mean((y - mean) ** 2, axis=(0, 2, 3), keepdims=True)
    yn = (y - mean) * jax.lax.rsqrt(var + eps)
    return jnp.maximum(
        yn * gamma[None, :, None, None] + beta[None, :, None, None], 0.0
    )


# -------------------------------- main --------------------------------------


if __name__ == "__main__":
    key = jax.random.PRNGKey(0)
    kx, kw, kb, kg, kbe = jax.random.split(key, 5)

    # Small shapes consistent with a GoogLeNet conv_block:
    # conv_block(in_channels=4, out_channels=8, kernel_size=3, stride=1, padding=1)
    N, Cin, H, W = 2, 4, 16, 16
    Cout, KH, KW = 8, 3, 3

    x = jax.random.normal(kx, (N, Cin, H, W), dtype=jnp.float32)
    w = jax.random.normal(kw, (Cout, Cin, KH, KW), dtype=jnp.float32) * 0.1
    b = jax.random.normal(kb, (Cout,), dtype=jnp.float32) * 0.1
    gamma = 1.0 + 0.1 * jax.random.normal(kg, (Cout,), dtype=jnp.float32)
    beta = 0.1 * jax.random.normal(kbe, (Cout,), dtype=jnp.float32)

    # tm=128 here so this toy problem (OH*OW = 256 per sample) still exercises the
    # multi-block resident-accumulator path: grid = (2 samples, 2 spatial blocks).
    out = conv_block_forward(x, w, b, gamma, beta, stride=1, padding=1, tm=128)
    out = jax.block_until_ready(out)

    ref = conv_block_reference(x, w, b, gamma, beta, stride=1, padding=1)
    ref = jax.block_until_ready(ref)

    assert out.shape == (N, Cout, H, W), out.shape
    max_err = float(jnp.max(jnp.abs(out - ref)))
    # bf16 MXU inputs + bf16 intermediate slab (f32 accumulation / f32 stats & BN math).
    assert jnp.allclose(out, ref, atol=2e-2, rtol=2e-2), max_err

    print("KERNEL_OK")
</pallas_src>

<mosaic_0001>
module attributes {stable_mosaic.version = 11 : i64} {
  func.func @_bn_relu_kernel(%arg0: i32, %arg1: memref<1x8x256xbf16, #tpu.memory_space<vmem>>, %arg2: memref<8x1xf32, #tpu.memory_space<vmem>>, %arg3: memref<8x1xf32, #tpu.memory_space<vmem>>, %arg4: memref<1x8x256xf32, #tpu.memory_space<vmem>>) attributes {dimension_semantics = [#tpu.dimension_semantics<parallel>], iteration_bounds = array<i64: 2>, scalar_prefetch = 0 : i64, scratch_operands = 0 : i64, tpu.core_type = #tpu.core_type<tc>, window_params = [{transform_indices = @transform_0, window_bounds = array<i64: 1, 8, 256>}, {pipeline_mode = #tpu.pipeline_mode<synchronous>, transform_indices = @transform_1, window_bounds = array<i64: 8, 1>}, {pipeline_mode = #tpu.pipeline_mode<synchronous>, transform_indices = @transform_2, window_bounds = array<i64: 8, 1>}, {transform_indices = @transform_3, window_bounds = array<i64: 1, 8, 256>}]} {
    %c0 = arith.constant 0 : index
    %c0_0 = arith.constant 0 : index
    %c0_1 = arith.constant 0 : index
    %0 = vector.load %arg1[%c0, %c0_0, %c0_1] : memref<1x8x256xbf16, #tpu.memory_space<vmem>>, vector<1x8x256xbf16>
    %1 = vector.shape_cast %0 : vector<1x8x256xbf16> to vector<8x256xbf16>
    %2 = arith.extf %1 : vector<8x256xbf16> to vector<8x256xf32>
    %c0_2 = arith.constant 0 : index
    %c0_3 = arith.constant 0 : index
    %3 = vector.load %arg2[%c0_2, %c0_3] : memref<8x1xf32, #tpu.memory_space<vmem>>, vector<8x1xf32>
    %4 = vector.broadcast %3 : vector<8x1xf32> to vector<8x256xf32>
    %5 = arith.mulf %2, %4 : vector<8x256xf32>
    %c0_4 = arith.constant 0 : index
    %c0_5 = arith.constant 0 : index
    %6 = vector.load %arg3[%c0_4, %c0_5] : memref<8x1xf32, #tpu.memory_space<vmem>>, vector<8x1xf32>
    %7 = vector.broadcast %6 : vector<8x1xf32> to vector<8x256xf32>
    %8 = arith.addf %5, %7 : vector<8x256xf32>
    %cst = arith.constant 0.000000e+00 : f32
    %9 = vector.broadcast %cst : f32 to vector<8x256xf32>
    %10 = arith.maximumf %8, %9 : vector<8x256xf32>
    %c0_6 = arith.constant 0 : index
    %c0_7 = arith.constant 0 : index
    %c0_8 = arith.constant 0 : index
    %11 = vector.load %arg4[%c0_6, %c0_7, %c0_8] : memref<1x8x256xf32, #tpu.memory_space<vmem>>, vector<1x8x256xf32>
    %12 = vector.shape_cast %11 : vector<1x8x256xf32> to vector<8x256xf32>
    %13 = vector.shape_cast %10 : vector<8x256xf32> to vector<1x8x256xf32>
    tpu.vector_store %arg4[%c0_6, %c0_7, %c0_8], %13 {strides = array<i32>} : memref<1x8x256xf32, #tpu.memory_space<vmem>>, vector<1x8x256xf32>,
    return
  }
  func.func @transform_0(%arg0: i32) -> (i32, i32, i32) {
    %c0_i32 = arith.constant 0 : i32
    %c0_i32_0 = arith.constant 0 : i32
    %c0_i32_1 = arith.constant 0 : i32
    return %arg0, %c0_i32, %c0_i32_0 : i32, i32, i32
  }
  func.func @transform_1(%arg0: i32) -> (i32, i32) {
    %c0_i32 = arith.constant 0 : i32
    %c0_i32_0 = arith.constant 0 : i32
    %c0_i32_1 = arith.constant 0 : i32
    return %c0_i32, %c0_i32_0 : i32, i32
  }
  func.func @transform_2(%arg0: i32) -> (i32, i32) {
    %c0_i32 = arith.constant 0 : i32
    %c0_i32_0 = arith.constant 0 : i32
    %c0_i32_1 = arith.constant 0 : i32
    return %c0_i32, %c0_i32_0 : i32, i32
  }
  func.func @transform_3(%arg0: i32) -> (i32, i32, i32) {
    %c0_i32 = arith.constant 0 : i32
    %c0_i32_0 = arith.constant 0 : i32
    %c0_i32_1 = arith.constant 0 : i32
    return %arg0, %c0_i32, %c0_i32_0 : i32, i32, i32
  }
}

module attributes {stable_mosaic.version = 11 : i64} {
  func.func @_matmul_stats_kernel(%arg0: i32, %arg1: i32, %arg2: memref<1x48x128xbf16, #tpu.memory_space<vmem>>, %arg3: memref<8x48xbf16, #tpu.memory_space<vmem>>, %arg4: memref<1x8x128xbf16, #tpu.memory_space<vmem>>, %arg5: memref<8x128xf32, #tpu.memory_space<vmem>>, %arg6: memref<8x128xf32, #tpu.memory_space<vmem>>) attributes {dimension_semantics = [#tpu.dimension_semantics<arbitrary>, #tpu.dimension_semantics<arbitrary>], iteration_bounds = array<i64: 2, 2>, scalar_prefetch = 0 : i64, scratch_operands = 0 : i64, tpu.core_type = #tpu.core_type<tc>, window_params = [{transform_indices = @transform_0, window_bounds = array<i64: 1, 48, 128>}, {pipeline_mode = #tpu.pipeline_mode<synchronous>, transform_indices = @transform_1, window_bounds = array<i64: 8, 48>}, {transform_indices = @transform_2, window_bounds = array<i64: 1, 8, 128>}, {pipeline_mode = #tpu.pipeline_mode<synchronous>, transform_indices = @transform_3, window_bounds = array<i64: 8, 128>}, {pipeline_mode = #tpu.pipeline_mode<synchronous>, transform_indices = @transform_4, window_bounds = array<i64: 8, 128>}]} {
    %c0_i32 = arith.constant 0 : i32
    %0 = arith.cmpi eq, %arg0, %c0_i32 : i32
    %c0_i32_0 = arith.constant 0 : i32
    %1 = arith.cmpi eq, %arg1, %c0_i32_0 : i32
    %2 = arith.andi %0, %1 : i1
    %3 = arith.extui %2 : i1 to i32
    %c0_i32_1 = arith.constant 0 : i32
    %4 = arith.cmpi ne, %3, %c0_i32_1 : i32
    scf.if %4 {
      %cst_17 = arith.constant 0.000000e+00 : f32
      %20 = vector.broadcast %cst_17 : f32 to vector<8x128xf32>
      %c0_18 = arith.constant 0 : index
      %c0_19 = arith.constant 0 : index
      %21 = vector.load %arg5[%c0_18, %c0_19] : memref<8x128xf32, #tpu.memory_space<vmem>>, vector<8x128xf32>
      tpu.vector_store %arg5[%c0_18, %c0_19], %20 {strides = array<i32>} : memref<8x128xf32, #tpu.memory_space<vmem>>, vector<8x128xf32>,
      %cst_20 = arith.constant 0.000000e+00 : f32
      %22 = vector.broadcast %cst_20 : f32 to vector<8x128xf32>
      %c0_21 = arith.constant 0 : index
      %c0_22 = arith.constant 0 : index
      %23 = vector.load %arg6[%c0_21, %c0_22] : memref<8x128xf32, #tpu.memory_space<vmem>>, vector<8x128xf32>
      tpu.vector_store %arg6[%c0_21, %c0_22], %22 {strides = array<i32>} : memref<8x128xf32, #tpu.memory_space<vmem>>, vector<8x128xf32>,
    } else {
    }
    %c0 = arith.constant 0 : index
    %c0_2 = arith.constant 0 : index
    %5 = vector.load %arg3[%c0, %c0_2] : memref<8x48xbf16, #tpu.memory_space<vmem>>, vector<8x48xbf16>
    %c0_3 = arith.constant 0 : index
    %c0_4 = arith.constant 0 : index
    %c0_5 = arith.constant 0 : index
    %6 = vector.load %arg2[%c0_3, %c0_4, %c0_5] : memref<1x48x128xbf16, #tpu.memory_space<vmem>>, vector<1x48x128xbf16>
    %7 = vector.shape_cast %6 : vector<1x48x128xbf16> to vector<48x128xbf16>
    %cst = arith.constant dense<0.000000e+00> : vector<8x128xf32>
    %8 = tpu.matmul %5, %7, %cst {dimension_numbers = #tpu.dot_dimension_numbers<[1], [0], [0], [1], [0, 0, 1, 1], [], []>} : vector<8x48xbf16>, vector<48x128xbf16>, vector<8x128xf32> -> vector<8x128xf32>
    %9 = arith.truncf %8 : vector<8x128xf32> to vector<8x128xbf16>
    %c0_6 = arith.constant 0 : index
    %c0_7 = arith.constant 0 : index
    %c0_8 = arith.constant 0 : index
    %10 = vector.load %arg4[%c0_6, %c0_7, %c0_8] : memref<1x8x128xbf16, #tpu.memory_space<vmem>>, vector<1x8x128xbf16>
    %11 = vector.shape_cast %10 : vector<1x8x128xbf16> to vector<8x128xbf16>
    %12 = vector.shape_cast %9 : vector<8x128xbf16> to vector<1x8x128xbf16>
    tpu.vector_store %arg4[%c0_6, %c0_7, %c0_8], %12 {strides = array<i32>} : memref<1x8x128xbf16, #tpu.memory_space<vmem>>, vector<1x8x128xbf16>,
    %c0_9 = arith.constant 0 : index
    %c0_10 = arith.constant 0 : index
    %13 = vector.load %arg5[%c0_9, %c0_10] : memref<8x128xf32, #tpu.memory_space<vmem>>, vector<8x128xf32>
    %c0_11 = arith.constant 0 : index
    %c0_12 = arith.constant 0 : index
    %14 = vector.load %arg6[%c0_11, %c0_12] : memref<8x128xf32, #tpu.memory_space<vmem>>, vector<8x128xf32>
    %15 = arith.addf %13, %8 : vector<8x128xf32>
    %16 = arith.mulf %8, %8 : vector<8x128xf32>
    %17 = arith.addf %14, %16 : vector<8x128xf32>
    %c0_13 = arith.constant 0 : index
    %c0_14 = arith.constant 0 : index
    %18 = vector.load %arg5[%c0_13, %c0_14] : memref<8x128xf32, #tpu.memory_space<vmem>>, vector<8x128xf32>
    tpu.vector_store %arg5[%c0_13, %c0_14], %15 {strides = array<i32>} : memref<8x128xf32, #tpu.memory_space<vmem>>, vector<8x128xf32>,
    %c0_15 = arith.constant 0 : index
    %c0_16 = arith.constant 0 : index
    %19 = vector.load %arg6[%c0_15, %c0_16] : memref<8x128xf32, #tpu.memory_space<vmem>>, vector<8x128xf32>
    tpu.vector_store %arg6[%c0_15, %c0_16], %17 {strides = array<i32>} : memref<8x128xf32, #tpu.memory_space<vmem>>, vector<8x128xf32>,
    return
  }
  func.func @transform_0(%arg0: i32, %arg1: i32) -> (i32, i32, i32) {
    %c0_i32 = arith.constant 0 : i32
    %c0_i32_0 = arith.constant 0 : i32
    return %arg0, %c0_i32, %arg1 : i32, i32, i32
  }
  func.func @transform_1(%arg0: i32, %arg1: i32) -> (i32, i32) {
    %c0_i32 = arith.constant 0 : i32
    %c0_i32_0 = arith.constant 0 : i32
    %c0_i32_1 = arith.constant 0 : i32
    return %c0_i32, %c0_i32_0 : i32, i32
  }
  func.func @transform_2(%arg0: i32, %arg1: i32) -> (i32, i32, i32) {
    %c0_i32 = arith.constant 0 : i32
    %c0_i32_0 = arith.constant 0 : i32
    return %arg0, %c0_i32, %arg1 : i32, i32, i32
  }
  func.func @transform_3(%arg0: i32, %arg1: i32) -> (i32, i32) {
    %c0_i32 = arith.constant 0 : i32
    %c0_i32_0 = arith.constant 0 : i32
    %c0_i32_1 = arith.constant 0 : i32
    return %c0_i32, %c0_i32_0 : i32, i32
  }
  func.func @transform_4(%arg0: i32, %arg1: i32) -> (i32, i32) {
    %c0_i32 = arith.constant 0 : i32
    %c0_i32_0 = arith.constant 0 : i32
    %c0_i32_1 = arith.constant 0 : i32
    return %c0_i32, %c0_i32_0 : i32, i32
  }
}

</mosaic_0001>

<llo_original>
// kernel: conv_block_forward.3
$region0: #{conv_block_forward.3}
  #allocation0 [shape = 'u32[]', space=smem, size = 0x4, offset = 0x4, fixed_abs, tag = 'smem constant byte address 0x4 - core index']
  #allocation1 [shape = 'u32[72,128]{1,0:T(1,128)}', space=vmem, size = 0x9000, scoped, tag = 'internal scratch']
  %s0 = inlined_call_operand.vmem [shape: bf16[2,8,256], index: 0, kind: input, shape index: {}]
  %s1 = inlined_call_operand.vmem [shape: f32[8,1], index: 1, kind: input, shape index: {}]
  %s2 = inlined_call_operand.vmem [shape: f32[8,1], index: 2, kind: input, shape index: {}]
  %s3 = inlined_call_operand.vmem [shape: f32[2,8,256], index: 3, kind: output, shape index: {}]
  %s4 = sld [smem:[#allocation0]]
  $region45: #{conv_block_forward.3} parent=0
    _
  %s6 = ssub.s32 1, %s4
  %s7 = scalar_select 0, %s6, %s4
  loop: start=0, step=1, limit=4
  $region2: #{conv_block_forward.3} parent=0 // loop_pre_header
    _
  $region3: #{conv_block_forward.3} parent=0 // loop_header
    %s9 = sphi 0, %s13
    %p10 = scmp.ge.s32.totalorder %s9, 4
    %s19 = sphi 0, %s21
    %s22 = sphi 0, %s19
    %s23 = sphi 0, %s22
    %s39 = sphi 0, %s23
    %s43 = sphi 0, %s43
    %s45 = sphi 0, %s43
    %s46 = sphi 0, %s45
    %s60 = sphi 0, %s46
    %s64 = sphi 0, %s64
    %s66 = sphi 0, %s64
    %s67 = sphi 0, %s66
    %s81 = sphi 0, %s67
    %s87 = sphi 0, %s89
    %s90 = sphi 0, %s87
    %s91 = sphi 0, %s90
    %s107 = sphi 0, %s91
  $region4: #{conv_block_forward.3} parent=0 // loop_header_branch
    %12 = sbr.rel (%p10) target = $region8
  $region5: #{conv_block_forward.3} parent=0 // loop_body
    %s14 = ssub.s32 %s9, 1
    %s15 = ssub.s32 %s9, 2
    %s16 = sadd.s32 %s9, 1
    %s17 = ssub.s32 %s9, %s16
    %p18 = scmp.eq.s32.totalorder %s17, 0
    %s20 = sadd.s32 %s19, 1
    %s21 = scalar_select %p18, %s19, %s20
    %p24 = pneg %p18
    %p25 = scmp.eq.s32.totalorder %s9, 1
    %p26 = por %p24, %p25
    %p27 = scmp.ne.s32.totalorder %s19, %s22
    %p28 = scmp.eq.s32.totalorder %s9, 0
    %p29 = por %p27, %p28
    %p30 = scmp.ne.s32.totalorder %s19, %s22
    %p31 = scmp.eq.s32.totalorder %s14, 1
    %p32 = por %p30, %p31
    %p33 = scmp.ne.s32.totalorder %s22, %s23
    %p34 = scmp.eq.s32.totalorder %s14, 0
    %p35 = por %p33, %p34
    %p36 = scmp.ne.s32.totalorder %s22, %s23
    %p37 = scmp.eq.s32.totalorder %s15, 1
    %p38 = por %p36, %p37
    %p40 = scmp.ne.s32.totalorder %s23, %s39
    %p41 = scmp.eq.s32.totalorder %s15, 0
    %p42 = por %p40, %p41
    %s44 = sadd.s32 %s43, 1
    %p47 = scmp.eq.s32.totalorder %s9, 1
    %p48 = scmp.ne.s32.totalorder %s43, %s45
    %p49 = scmp.eq.s32.totalorder %s9, 0
    %p50 = por %p48, %p49
    %p51 = scmp.ne.s32.totalorder %s43, %s45
    %p52 = scmp.eq.s32.totalorder %s14, 1
    %p53 = por %p51, %p52
    %p54 = scmp.ne.s32.totalorder %s45, %s46
    %p55 = scmp.eq.s32.totalorder %s14, 0
    %p56 = por %p54, %p55
    %p57 = scmp.ne.s32.totalorder %s45, %s46
    %p58 = scmp.eq.s32.totalorder %s15, 1
    %p59 = por %p57, %p58
    %p61 = scmp.ne.s32.totalorder %s46, %s60
    %p62 = scmp.eq.s32.totalorder %s15, 0
    %p63 = por %p61, %p62
    %s65 = sadd.s32 %s64, 1
    %p68 = scmp.eq.s32.totalorder %s9, 1
    %p69 = scmp.ne.s32.totalorder %s64, %s66
    %p70 = scmp.eq.s32.totalorder %s9, 0
    %p71 = por %p69, %p70
    %p72 = scmp.ne.s32.totalorder %s64, %s66
    %p73 = scmp.eq.s32.totalorder %s14, 1
    %p74 = por %p72, %p73
    %p75 = scmp.ne.s32.totalorder %s66, %s67
    %p76 = scmp.eq.s32.totalorder %s14, 0
    %p77 = por %p75, %p76
    %p78 = scmp.ne.s32.totalorder %s66, %s67
    %p79 = scmp.eq.s32.totalorder %s15, 1
    %p80 = por %p78, %p79
    %p82 = scmp.ne.s32.totalorder %s67, %s81
    %p83 = scmp.eq.s32.totalorder %s15, 0
    %p84 = por %p82, %p83
    %s85 = ssub.s32 %s9, %s16
    %p86 = scmp.eq.s32.totalorder %s85, 0
    %s88 = sadd.s32 %s87, 1
    %s89 = scalar_select %p86, %s87, %s88
    %p92 = pneg %p86
    %p93 = scmp.eq.s32.totalorder %s9, 1
    %p94 = por %p92, %p93
    %p95 = scmp.ne.s32.totalorder %s87, %s90
    %p96 = scmp.eq.s32.totalorder %s9, 0
    %p97 = por %p95, %p96
    %p98 = scmp.ne.s32.totalorder %s87, %s90
    %p99 = scmp.eq.s32.totalorder %s14, 1
    %p100 = por %p98, %p99
    %p101 = scmp.ne.s32.totalorder %s90, %s91
    %p102 = scmp.eq.s32.totalorder %s14, 0
    %p103 = por %p101, %p102
    %p104 = scmp.ne.s32.totalorder %s90, %s91
    %p105 = scmp.eq.s32.totalorder %s15, 1
    %p106 = por %p104, %p105
    %p108 = scmp.ne.s32.totalorder %s91, %s107
    %p109 = scmp.eq.s32.totalorder %s15, 0
    %p110 = por %p108, %p109
    %p111 = scmp.le.s32.totalorder 1, %s9
    %p112 = scmp.lt.s32.totalorder %s9, 3
    %p113 = pnand %p111, %p112
    %p114 = pneg %p113
    // Predicated region
    $region9: #{conv_block_forward.3} parent=5 // pred_check
      _
    $region10: #{conv_block_forward.3} parent=5 // pred_check_branch
      %116 = sbr.rel (%p113) target = $region12
    $region11: #{conv_block_forward.3} parent=5 // pred_region
      %s117 = ssub.s32 %s9, 1
      // Predicated region
      $region13: #{conv_block_forward.3} parent=11 // pred_check
        %p118 = pneg %p56
      $region14: #{conv_block_forward.3} parent=11 // pred_check_branch
        %120 = sbr.rel (%p118) target = $region16
      $region15: #{conv_block_forward.3} parent=11 // pred_region
        _
      $region16: #{conv_block_forward.3} parent=11 // pred_fallthru
        _
      // Predicated region
      $region17: #{conv_block_forward.3} parent=11 // pred_check
        %p121 = pneg %p77
      $region18: #{conv_block_forward.3} parent=11 // pred_check_branch
        %123 = sbr.rel (%p121) target = $region20
      $region19: #{conv_block_forward.3} parent=11 // pred_region
        _
      $region20: #{conv_block_forward.3} parent=11 // pred_fallthru
        _
    $region12: #{conv_block_forward.3} parent=5 // pred_fallthru
      _
    %p124 = scmp.lt.s32.totalorder %s9, 2
    // Predicated region
    $region21: #{conv_block_forward.3} parent=5 // pred_check
      %p125 = pneg %p124
    $region22: #{conv_block_forward.3} parent=5 // pred_check_branch
      %127 = sbr.rel (%p125) target = $region24
    $region23: #{conv_block_forward.3} parent=5 // pred_region
      // Predicated region
      $region25: #{conv_block_forward.3} parent=23 // pred_check
        %p128 = pneg %p29
      $region26: #{conv_block_forward.3} parent=23 // pred_check_branch
        %130 = sbr.rel (%p128) target = $region28
      $region27: #{conv_block_forward.3} parent=23 // pred_region
        %p131 = scmp.lt.s32.totalorder %s9, 1
        %s132 = scalar_select %p131, %s9, 1
        %s133 = smul.addr %s132, 2
        %s134 = smul.addr %s133, 4
        %s135 = scalar_lea.vmem %s0, %s134
      $region28: #{conv_block_forward.3} parent=23 // pred_fallthru
        _
    $region24: #{conv_block_forward.3} parent=5 // pred_fallthru
      _
    %p136 = scmp.le.s32.totalorder 1, %s9
    %p137 = scmp.lt.s32.totalorder %s9, 3
    %p138 = pnand %p136, %p137
    %p139 = pneg %p138
    // Predicated region
    $region29: #{conv_block_forward.3} parent=5 // pred_check
      _
    $region30: #{conv_block_forward.3} parent=5 // pred_check_branch
      %141 = sbr.rel (%p138) target = $region32
    $region31: #{conv_block_forward.3} parent=5 // pred_region
      %s142 = ssub.s32 %s9, 1
      %p143 = scmp.lt.s32.totalorder %s14, 1
      %s144 = scalar_select %p143, %s14, 1
      %s145 = smul.addr %s144, 2
      %s146 = smul.addr %s145, 4
      %s147 = scalar_lea.vmem %s0, %s146
      %p148 = pneg %p35
      %p149 = pneg %p32
      %p150 = pneg %p56
      %p151 = pneg %p53
      %p152 = pneg %p77
      %p153 = pneg %p74
      %p154 = pneg %p103
      %p155 = pneg %p100
      %p156 = scmp.lt.s32.totalorder %s14, 1
      %s157 = scalar_select %p156, %s14, 1
      %s158 = smul.addr %s157, 2
      %s159 = smul.addr %s158, 8
      %s160 = scalar_lea.vmem %s3, %s159
      %p161 = scmp.lt.s32.totalorder %s14, 1
      %s162 = scalar_select %p161, %s14, 1
      %s163 = smul.addr %s162, 2
      %s164 = smul.addr %s163, 4
      %s165 = scalar_lea.vmem %s0, %s164
      %p166 = scmp.lt.s32.totalorder %s14, 1
      %s167 = scalar_select %p166, %s14, 1
      %s168 = smul.addr %s167, 2
      %s169 = smul.addr %s168, 8
      %s170 = scalar_lea.vmem %s3, %s169
      %v171 = vld [vmem:[%s165] sm:$0xff]
      %v172 = vunpack.c.l.bf16 %v171
      %v173 = vunpack.c.h.bf16 %v171
      %v174 = vld [vmem:[%s1] sm:$0xff]
      %176 = vset.pattern.permute.xlu0 0
      %177 = vperm.xlu0 %176, %v174
      %v178 = vpop.permute.xlu0 %177
      %v180 = vmul.f32 %v172, %v178
      %v181 = vmul.f32 %v173, %v178
      %v182 = vld [vmem:[%s2] sm:$0xff]
      %184 = vset.pattern.permute.xlu0 0
      %185 = vperm.xlu0 %184, %v182
      %v186 = vpop.permute.xlu0 %185
      %v188 = vadd.f32 %v180, %v186
      %v189 = vadd.f32 %v181, %v186
      %v190 = vmax.f32 %v188, 0.0
      %v191 = vmax.f32 %v189, 0.0
      %192 = vst [vmem:[%s170] sm:$0xff] %v190
      %193 = vst [vmem:[%s170 + $0x8] sm:$0xff] %v191
      %p194 = scmp.lt.s32.totalorder %s14, 1
      %s195 = scalar_select %p194, %s14, 1
      %s196 = smul.addr %s195, 2
      %s197 = smul.addr %s196, 8
      %s198 = scalar_lea.vmem %s3, %s197
      // Predicated region
      $region33: #{conv_block_forward.3} parent=31 // pred_check
        %p199 = pneg %p100
      $region34: #{conv_block_forward.3} parent=31 // pred_check_branch
        %201 = sbr.rel (%p199) target = $region36
      $region35: #{conv_block_forward.3} parent=31 // pred_region
        _
      $region36: #{conv_block_forward.3} parent=31 // pred_fallthru
        _
    $region32: #{conv_block_forward.3} parent=5 // pred_fallthru
      _
    %p202 = scmp.le.s32.totalorder 2, %s9
    // Predicated region
    $region37: #{conv_block_forward.3} parent=5 // pred_check
      %p203 = pneg %p202
    $region38: #{conv_block_forward.3} parent=5 // pred_check_branch
      %205 = sbr.rel (%p203) target = $region40
    $region39: #{conv_block_forward.3} parent=5 // pred_region
      %s206 = ssub.s32 %s9, 2
      // Predicated region
      $region41: #{conv_block_forward.3} parent=39 // pred_check
        %p207 = pneg %p106
      $region42: #{conv_block_forward.3} parent=39 // pred_check_branch
        %209 = sbr.rel (%p207) target = $region44
      $region43: #{conv_block_forward.3} parent=39 // pred_region
        %p210 = scmp.lt.s32.totalorder %s15, 1
        %s211 = scalar_select %p210, %s15, 1
        %s212 = smul.addr %s211, 2
        %s213 = smul.addr %s212, 8
        %s214 = scalar_lea.vmem %s3, %s213
      $region44: #{conv_block_forward.3} parent=39 // pred_fallthru
        _
    $region40: #{conv_block_forward.3} parent=5 // pred_fallthru
      _
  $region6: #{conv_block_forward.3} parent=0 // loop_footer
    %s13 = sadd.s32 1, %s9
  $region7: #{conv_block_forward.3} parent=0 // loop_footer_branch
    %8 = sbr.rel target = $region3
  $region8: #{conv_block_forward.3} parent=0 // loop_exit
    _

// kernel: conv_block_forward.2
$region0: #{conv_block_forward.2}
  #allocation0 [shape = 'u32[]', space=smem, size = 0x4, offset = 0x4, fixed_abs, tag = 'smem constant byte address 0x4 - core index']
  #allocation1 [shape = 'u32[72,128]{1,0:T(1,128)}', space=vmem, size = 0x9000, scoped, tag = 'internal scratch']
  %s0 = inlined_call_operand.vmem [shape: bf16[2,48,256], index: 0, kind: input, shape index: {}]
  %s1 = inlined_call_operand.vmem [shape: bf16[8,48], index: 1, kind: input, shape index: {}]
  %s2 = inlined_call_operand.vmem [shape: bf16[2,8,256], index: 2, kind: output, shape index: {0}]
  %s3 = inlined_call_operand.vmem [shape: f32[8,128], index: 3, kind: output, shape index: {1}]
  %s4 = inlined_call_operand.vmem [shape: f32[8,128], index: 4, kind: output, shape index: {2}]
  %5 = xla_tuple %s2, %s3, %s4
  %s6 = sld [smem:[#allocation0]]
  $region102: #{conv_block_forward.2} parent=0
    _
  %s8 = ssub.s32 1, %s6
  %s9 = scalar_select 0, %s8, %s6
  $region1: #{conv_block_forward.2} parent=0
    #allocation2 [shape = 'u8[24576]{0}', space=vmem, size = 0x6000, scoped, tag = 'input window, operand 0']
    loop: start=0, step=1, limit=6
    $region2: #{conv_block_forward.2} parent=1 // loop_pre_header
      _
    $region3: #{conv_block_forward.2} parent=1 // loop_header
      %s11 = sphi 0, %s15
      %p12 = scmp.ge.s32.totalorder %s11, 6
      %s18 = sphi 0, %s30
      %s19 = sphi 0, %s26
      %s20 = sphi 0, %s18
      %s21 = sphi 0, %s19
      %s22 = sphi 0, %s20
      %s23 = sphi 0, %s21
      %s35 = sphi 0, %s37
      %s38 = sphi 0, %s35
      %s39 = sphi 0, %s38
      %s55 = sphi 0, %s39
      %s59 = sphi 0, %s59
      %s61 = sphi 0, %s59
      %s62 = sphi 0, %s61
      %s76 = sphi 0, %s62
      %s84 = sphi 0, %s86
      %s87 = sphi 0, %s84
      %s88 = sphi 0, %s87
      %s104 = sphi 0, %s88
      %s108 = sphi 0, %s108
      %s110 = sphi 0, %s108
      %s111 = sphi 0, %s110
      %s125 = sphi 0, %s111
      %s129 = sphi 0, %s129
      %s131 = sphi 0, %s129
      %s132 = sphi 0, %s131
      %s146 = sphi 0, %s132
    $region4: #{conv_block_forward.2} parent=1 // loop_header_branch
      %14 = sbr.rel (%p12) target = $region8
    $region5: #{conv_block_forward.2} parent=1 // loop_body
      %s16 = ssub.s32 %s11, 1
      %s17 = ssub.s32 %s11, 2
      %s24 = sadd.s32 1, %s19
      %p25 = scmp.ge.s32.totalorder %s24, 2
      %s26 = scalar_select %p25, 0, %s24
      %s27 = sadd.s32 1, %s18
      %s28 = scalar_select %p25, %s27, %s18
      %p29 = scmp.ge.s32.totalorder %s28, 2
      %s30 = scalar_select %p29, 0, %s28
      %s31 = ssub.s32 %s18, %s30
      %s32 = ssub.s32 %s19, %s26
      %s33 = sor.u32 %s31, %s32
      %p34 = scmp.eq.s32.totalorder %s33, 0
      %s36 = sadd.s32 %s35, 1
      %s37 = scalar_select %p34, %s35, %s36
      %p40 = pneg %p34
      %p41 = scmp.eq.s32.totalorder %s11, 3
      %p42 = por %p40, %p41
      %p43 = scmp.ne.s32.totalorder %s35, %s38
      %p44 = scmp.eq.s32.totalorder %s11, 0
      %p45 = por %p43, %p44
      %p46 = scmp.ne.s32.totalorder %s35, %s38
      %p47 = scmp.eq.s32.totalorder %s16, 3
      %p48 = por %p46, %p47
      %p49 = scmp.ne.s32.totalorder %s38, %s39
      %p50 = scmp.eq.s32.totalorder %s16, 0
      %p51 = por %p49, %p50
      %p52 = scmp.ne.s32.totalorder %s38, %s39
      %p53 = scmp.eq.s32.totalorder %s17, 3
      %p54 = por %p52, %p53
      %p56 = scmp.ne.s32.totalorder %s39, %s55
      %p57 = scmp.eq.s32.totalorder %s17, 0
      %p58 = por %p56, %p57
      %s60 = sadd.s32 %s59, 1
      %p63 = scmp.eq.s32.totalorder %s11, 3
      %p64 = scmp.ne.s32.totalorder %s59, %s61
      %p65 = scmp.eq.s32.totalorder %s11, 0
      %p66 = por %p64, %p65
      %p67 = scmp.ne.s32.totalorder %s59, %s61
      %p68 = scmp.eq.s32.totalorder %s16, 3
      %p69 = por %p67, %p68
      %p70 = scmp.ne.s32.totalorder %s61, %s62
      %p71 = scmp.eq.s32.totalorder %s16, 0
      %p72 = por %p70, %p71
      %p73 = scmp.ne.s32.totalorder %s61, %s62
      %p74 = scmp.eq.s32.totalorder %s17, 3
      %p75 = por %p73, %p74
      %p77 = scmp.ne.s32.totalorder %s62, %s76
      %p78 = scmp.eq.s32.totalorder %s17, 0
      %p79 = por %p77, %p78
      %s80 = ssub.s32 %s18, %s30
      %s81 = ssub.s32 %s19, %s26
      %s82 = sor.u32 %s80, %s81
      %p83 = scmp.eq.s32.totalorder %s82, 0
      %s85 = sadd.s32 %s84, 1
      %s86 = scalar_select %p83, %s84, %s85
      %p89 = pneg %p83
      %p90 = scmp.eq.s32.totalorder %s11, 3
      %p91 = por %p89, %p90
      %p92 = scmp.ne.s32.totalorder %s84, %s87
      %p93 = scmp.eq.s32.totalorder %s11, 0
      %p94 = por %p92, %p93
      %p95 = scmp.ne.s32.totalorder %s84, %s87
      %p96 = scmp.eq.s32.totalorder %s16, 3
      %p97 = por %p95, %p96
      %p98 = scmp.ne.s32.totalorder %s87, %s88
      %p99 = scmp.eq.s32.totalorder %s16, 0
      %p100 = por %p98, %p99
      %p101 = scmp.ne.s32.totalorder %s87, %s88
      %p102 = scmp.eq.s32.totalorder %s17, 3
      %p103 = por %p101, %p102
      %p105 = scmp.ne.s32.totalorder %s88, %s104
      %p106 = scmp.eq.s32.totalorder %s17, 0
      %p107 = por %p105, %p106
      %s109 = sadd.s32 %s108, 1
      %p112 = scmp.eq.s32.totalorder %s11, 3
      %p113 = scmp.ne.s32.totalorder %s108, %s110
      %p114 = scmp.eq.s32.totalorder %s11, 0
      %p115 = por %p113, %p114
      %p116 = scmp.ne.s32.totalorder %s108, %s110
      %p117 = scmp.eq.s32.totalorder %s16, 3
      %p118 = por %p116, %p117
      %p119 = scmp.ne.s32.totalorder %s110, %s111
      %p120 = scmp.eq.s32.totalorder %s16, 0
      %p121 = por %p119, %p120
      %p122 = scmp.ne.s32.totalorder %s110, %s111
      %p123 = scmp.eq.s32.totalorder %s17, 3
      %p124 = por %p122, %p123
      %p126 = scmp.ne.s32.totalorder %s111, %s125
      %p127 = scmp.eq.s32.totalorder %s17, 0
      %p128 = por %p126, %p127
      %s130 = sadd.s32 %s129, 1
      %p133 = scmp.eq.s32.totalorder %s11, 3
      %p134 = scmp.ne.s32.totalorder %s129, %s131
      %p135 = scmp.eq.s32.totalorder %s11, 0
      %p136 = por %p134, %p135
      %p137 = scmp.ne.s32.totalorder %s129, %s131
      %p138 = scmp.eq.s32.totalorder %s16, 3
      %p139 = por %p137, %p138
      %p140 = scmp.ne.s32.totalorder %s131, %s132
      %p141 = scmp.eq.s32.totalorder %s16, 0
      %p142 = por %p140, %p141
      %p143 = scmp.ne.s32.totalorder %s131, %s132
      %p144 = scmp.eq.s32.totalorder %s17, 3
      %p145 = por %p143, %p144
      %p147 = scmp.ne.s32.totalorder %s132, %s146
      %p148 = scmp.eq.s32.totalorder %s17, 0
      %p149 = por %p147, %p148
      %p150 = scmp.le.s32.totalorder 1, %s11
      %p151 = scmp.lt.s32.totalorder %s11, 5
      %p152 = pnand %p150, %p151
      %p153 = pneg %p152
      // Predicated region
      $region9: #{conv_block_forward.2} parent=5 // pred_check
        _
      $region10: #{conv_block_forward.2} parent=5 // pred_check_branch
        %155 = sbr.rel (%p152) target = $region12
      $region11: #{conv_block_forward.2} parent=5 // pred_region
        %s156 = ssub.s32 %s11, 1
        // Predicated region
        $region13: #{conv_block_forward.2} parent=11 // pred_check
          %p157 = pneg %p72
        $region14: #{conv_block_forward.2} parent=11 // pred_check_branch
          %159 = sbr.rel (%p157) target = $region16
        $region15: #{conv_block_forward.2} parent=11 // pred_region
          _
        $region16: #{conv_block_forward.2} parent=11 // pred_fallthru
          _
      $region12: #{conv_block_forward.2} parent=5 // pred_fallthru
        _
      %p160 = scmp.lt.s32.totalorder %s11, 4
      // Predicated region
      $region17: #{conv_block_forward.2} parent=5 // pred_check
        %p161 = pneg %p160
      $region18: #{conv_block_forward.2} parent=5 // pred_check_branch
        %163 = sbr.rel (%p161) target = $region20
      $region19: #{conv_block_forward.2} parent=5 // pred_region
        // Predicated region
        $region21: #{conv_block_forward.2} parent=19 // pred_check
          %p164 = pneg %p45
        $region22: #{conv_block_forward.2} parent=19 // pred_check_branch
          %166 = sbr.rel (%p164) target = $region24
        $region23: #{conv_block_forward.2} parent=19 // pred_region
          %s167 = sand.u32 %s35, 1
          %s168 = sand.u32 %s35, 1
          %s169 = smul.addr %s168, 24
          %s170 = scalar_lea.vmem [#allocation2], %s169
          %s171 = smul.addr %s18, 12
          %s172 = sadd.s32 %s19, %s171
          %s173 = smul.addr %s172, 4
          %s174 = scalar_lea.vmem %s0, %s173
          // Predicated region
          $region25: #{conv_block_forward.2} parent=23 // pred_check
            _
          $region26: #{conv_block_forward.2} parent=23 // pred_check_branch
            %176 = sbr.rel (0) target = $region28
          $region27: #{conv_block_forward.2} parent=23 // pred_region
            // Predicated region
            $region29: #{conv_block_forward.2} parent=27 // pred_check
              _
            $region30: #{conv_block_forward.2} parent=27 // pred_check_branch
              %178 = sbr.rel target = $region32
            $region31: #{conv_block_forward.2} parent=27 // pred_region
              // Predicated region
              $region44: #{conv_block_forward.2} parent=31 // pred_check
                _
              $region45: #{conv_block_forward.2} parent=31 // pred_check_branch
                %204 = sbr.rel (0) target = $region47
              $region46: #{conv_block_forward.2} parent=31 // pred_region
                loop: start=0, step=1, limit=1
                $region48: #{conv_block_forward.2} parent=46 // loop_pre_header
                  _
                $region49: #{conv_block_forward.2} parent=46 // loop_header
                  %s206 = sphi 0, %s210
                  %p207 = scmp.ge.s32.totalorder %s206, 1
                  %s211 = sphi %s174, %s174
                  %s212 = sphi %s170, %s170
                $region50: #{conv_block_forward.2} parent=46 // loop_header_branch
                  %209 = sbr.rel (%p207) target = $region54
                $region51: #{conv_block_forward.2} parent=46 // loop_body
                  _
                $region52: #{conv_block_forward.2} parent=46 // loop_footer
                  %s210 = sadd.s32 1, %s206
                $region53: #{conv_block_forward.2} parent=46 // loop_footer_branch
                  %205 = sbr.rel target = $region49
                $region54: #{conv_block_forward.2} parent=46 // loop_exit
                  _
                %s214 = ssub.s32 16, 1
                loop: start=0, step=1, limit=1
                $region55: #{conv_block_forward.2} parent=46 // loop_pre_header
                  _
                $region56: #{conv_block_forward.2} parent=46 // loop_header
                  %s216 = sphi 0, %s220
                  %p217 = scmp.ge.s32.totalorder %s216, 1
                  %s221 = sphi %s174, %s174
                  %s222 = sphi %s170, %s170
                $region57: #{conv_block_forward.2} parent=46 // loop_header_branch
                  %219 = sbr.rel (%p217) target = $region61
                $region58: #{conv_block_forward.2} parent=46 // loop_body
                  %v223 = vld [vmem:[%s221] sm:%s214]
                  %224 = vst [vmem:[%s222] sm:%s214] %v223
                  %v225 = vld [vmem:[%s221 + $0x8] sm:%s214]
                  %226 = vst [vmem:[%s222 + $0x4] sm:%s214] %v225
                  %v227 = vld [vmem:[%s221 + $0x10] sm:%s214]
                  %228 = vst [vmem:[%s222 + $0x8] sm:%s214] %v227
                  %v229 = vld [vmem:[%s221 + $0x18] sm:%s214]
                  %230 = vst [vmem:[%s222 + $0xc] sm:%s214] %v229
                  %v231 = vld [vmem:[%s221 + $0x20] sm:%s214]
                  %232 = vst [vmem:[%s222 + $0x10] sm:%s214] %v231
                  %v233 = vld [vmem:[%s221 + $0x28] sm:%s214]
                  %234 = vst [vmem:[%s222 + $0x14] sm:%s214] %v233
                $region59: #{conv_block_forward.2} parent=46 // loop_footer
                  %s220 = sadd.s32 1, %s216
                $region60: #{conv_block_forward.2} parent=46 // loop_footer_branch
                  %215 = sbr.rel target = $region56
                $region61: #{conv_block_forward.2} parent=46 // loop_exit
                  _
              $region47: #{conv_block_forward.2} parent=31 // pred_fallthru
                _
            $region32: #{conv_block_forward.2} parent=27 // pred_fallthru
              _
            // Predicated region
            $region33: #{conv_block_forward.2} parent=27 // pred_check
              _
            $region34: #{conv_block_forward.2} parent=27 // pred_check_branch
              %180 = sbr.rel (0) target = $region36
            $region35: #{conv_block_forward.2} parent=27 // pred_region
              %s182 = ssub.s32 16, 1
              loop: start=0, step=1, limit=1
              $region37: #{conv_block_forward.2} parent=35 // loop_pre_header
                _
              $region38: #{conv_block_forward.2} parent=35 // loop_header
                %s184 = sphi 0, %s188
                %p185 = scmp.ge.s32.totalorder %s184, 1
                %s189 = sphi %s174, %s174
                %s190 = sphi %s170, %s170
              $region39: #{conv_block_forward.2} parent=35 // loop_header_branch
                %187 = sbr.rel (%p185) target = $region43
              $region40: #{conv_block_forward.2} parent=35 // loop_body
                %v191 = vld [vmem:[%s189] sm:%s182]
                %192 = vst [vmem:[%s190] sm:%s182] %v191
                %v193 = vld [vmem:[%s189 + $0x8] sm:%s182]
                %194 = vst [vmem:[%s190 + $0x4] sm:%s182] %v193
                %v195 = vld [vmem:[%s189 + $0x10] sm:%s182]
                %196 = vst [vmem:[%s190 + $0x8] sm:%s182] %v195
                %v197 = vld [vmem:[%s189 + $0x18] sm:%s182]
                %198 = vst [vmem:[%s190 + $0xc] sm:%s182] %v197
                %v199 = vld [vmem:[%s189 + $0x20] sm:%s182]
                %200 = vst [vmem:[%s190 + $0x10] sm:%s182] %v199
                %v201 = vld [vmem:[%s189 + $0x28] sm:%s182]
                %202 = vst [vmem:[%s190 + $0x14] sm:%s182] %v201
              $region41: #{conv_block_forward.2} parent=35 // loop_footer
                %s188 = sadd.s32 1, %s184
              $region42: #{conv_block_forward.2} parent=35 // loop_footer_branch
                %183 = sbr.rel target = $region38
              $region43: #{conv_block_forward.2} parent=35 // loop_exit
                _
            $region36: #{conv_block_forward.2} parent=27 // pred_fallthru
              _
          $region28: #{conv_block_forward.2} parent=23 // pred_fallthru
            _
          %235 = vnop
        $region24: #{conv_block_forward.2} parent=19 // pred_fallthru
          _
      $region20: #{conv_block_forward.2} parent=5 // pred_fallthru
        _
      %p236 = scmp.le.s32.totalorder 1, %s11
      %p237 = scmp.lt.s32.totalorder %s11, 5
      %p238 = pnand %p236, %p237
      %p239 = pneg %p238
      // Predicated region
      $region62: #{conv_block_forward.2} parent=5 // pred_check
        _
      $region63: #{conv_block_forward.2} parent=5 // pred_check_branch
        %241 = sbr.rel (%p238) target = $region65
      $region64: #{conv_block_forward.2} parent=5 // pred_region
        %s242 = ssub.s32 %s11, 1
        %s243 = sand.u32 %s38, 1
        %s244 = sand.u32 %s38, 1
        %s245 = smul.addr %s244, 24
        %s246 = scalar_lea.vmem [#allocation2], %s245
        // Predicated region
        $region66: #{conv_block_forward.2} parent=64 // pred_check
          %p247 = pneg %p51
        $region67: #{conv_block_forward.2} parent=64 // pred_check_branch
          %249 = sbr.rel (%p247) target = $region69
        $region68: #{conv_block_forward.2} parent=64 // pred_region
          _
        $region69: #{conv_block_forward.2} parent=64 // pred_fallthru
          _
        %s250 = sand.u32 %s38, 1
        %s251 = sand.u32 %s38, 1
        %s252 = smul.addr %s251, 24
        %s253 = scalar_lea.vmem [#allocation2], %s252
        %p254 = pneg %p51
        %p255 = pneg %p48
        %p256 = pneg %p72
        %p257 = pneg %p69
        %p258 = pneg %p100
        %p259 = pneg %p97
        %p260 = scmp.lt.s32.totalorder %s20, 1
        %s261 = scalar_select %p260, %s20, 1
        %p262 = scmp.lt.s32.totalorder %s21, 1
        %s263 = scalar_select %p262, %s21, 1
        %s264 = smul.addr %s261, 2
        %s265 = sadd.s32 %s263, %s264
        %s266 = smul.addr %s265, 4
        %s267 = scalar_lea.vmem %s2, %s266
        %p268 = pneg %p121
        %p269 = pneg %p118
        %p270 = pneg %p142
        %p271 = pneg %p139
        %p272 = scmp.lt.s32.totalorder %s20, 1
        %s273 = scalar_select %p272, %s20, 1
        %p274 = scmp.lt.s32.totalorder %s21, 1
        %s275 = scalar_select %p274, %s21, 1
        %s276 = smul.addr %s273, 2
        %s277 = sadd.s32 %s275, %s276
        %s278 = smul.addr %s277, 4
        %s279 = scalar_lea.vmem %s2, %s278
        %p281 = scmp.eq.s32.totalorder %s20, 0
        %p282 = scmp.eq.s32.totalorder %s21, 0
        %p283 = pnand %p281, %p282
        %p284 = pneg %p283
        // Predicated region
        $region70: #{conv_block_forward.2} parent=64 // pred_check
          _
        $region71: #{conv_block_forward.2} parent=64 // pred_check_branch
          %286 = sbr.rel (%p283) target = $region73
        $region72: #{conv_block_forward.2} parent=64 // pred_region
          %287 = vst [vmem:[%s3] sm:$0xff] 0.0
          %288 = vst [vmem:[%s4] sm:$0xff] 0.0
        $region73: #{conv_block_forward.2} parent=64 // pred_fallthru
          _
        %v289 = vld [vmem:[%s1] sm:$0xf]
        %v290 = vld [vmem:[%s246] sm:$0xf]
        %v291 = vld [vmem:[%s246 + $0x4] sm:$0xf]
        %v292 = vld [vmem:[%s246 + $0x8] sm:$0xf]
        %v293 = vld [vmem:[%s246 + $0xc] sm:$0xf]
        %v294 = vld [vmem:[%s246 + $0x10] sm:$0xf]
        %v295 = vld [vmem:[%s246 + $0x14] sm:$0xf]
        %v302 = vunpack.c.l.b16 %v290
        %v303 = vunpack.c.l.b16 %v291
        %v304 = vunpack.c.l.b16 %v292
        %v305 = vunpack.c.l.b16 %v293
        %v306 = vunpack.c.l.b16 %v294
        %v307 = vunpack.c.l.b16 %v295
        %v308 = vpack.c.b16 %v303, %v302
        %v309 = vpack.c.b16 %v305, %v304
        %v310 = vpack.c.b16 %v307, %v306
        %vm314 = vcmask 392192
        %v316 = vsel %vm314, %v289, 0
        %318 = vmatpush.bf16.msra.mxu0 0
        %319 = vmatpush.bf16.msra.mxu0 0
        %320 = vmatpush.bf16.msra.mxu0 0
        %321 = vmatpush.bf16.msra.mxu0 0
        %322 = vmatpush.bf16.msra.mxu0 0
        %323 = vmatpush.bf16.msra.mxu0 %v310
        %324 = vmatpush.bf16.msra.mxu0 %v309
        %325 = vmatpush.bf16.msra.mxu0 %v308
        %326 = vmatmul.bf16.gmra.mxu0 %v316
        %v327 = vpop.f32.mrf.mxu0
        %v328 = vadd.f32 0.0, %v327
        %v329 = vpop.f32.mrf.mxu0
        %330 = vdwg.mxu0
        %v331 = vpack.c.bf16 %v328, %v328
        %332 = vst [vmem:[%s279] sm:$0xf] %v331
        %v333 = vld [vmem:[%s3] sm:$0xff]
        %v334 = vld [vmem:[%s4] sm:$0xff]
        %v335 = vadd.f32 %v333, %v328
        %v336 = vmul.f32 %v328, %v328
        %v337 = vadd.f32 %v334, %v336
        %338 = vst [vmem:[%s3] sm:$0xff] %v335
        %339 = vst [vmem:[%s4] sm:$0xff] %v337
        %p340 = scmp.lt.s32.totalorder %s20, 1
        %s341 = scalar_select %p340, %s20, 1
        %p342 = scmp.lt.s32.totalorder %s21, 1
        %s343 = scalar_select %p342, %s21, 1
        %s344 = smul.addr %s341, 2
        %s345 = sadd.s32 %s343, %s344
        %s346 = smul.addr %s345, 4
        %s347 = scalar_lea.vmem %s2, %s346
        // Predicated region
        $region74: #{conv_block_forward.2} parent=64 // pred_check
          %p348 = pneg %p97
        $region75: #{conv_block_forward.2} parent=64 // pred_check_branch
          %350 = sbr.rel (%p348) target = $region77
        $region76: #{conv_block_forward.2} parent=64 // pred_region
          _
        $region77: #{conv_block_forward.2} parent=64 // pred_fallthru
          _
        // Predicated region
        $region78: #{conv_block_forward.2} parent=64 // pred_check
          %p351 = pneg %p118
        $region79: #{conv_block_forward.2} parent=64 // pred_check_branch
          %353 = sbr.rel (%p351) target = $region81
        $region80: #{conv_block_forward.2} parent=64 // pred_region
          _
        $region81: #{conv_block_forward.2} parent=64 // pred_fallthru
          _
        // Predicated region
        $region82: #{conv_block_forward.2} parent=64 // pred_check
          %p354 = pneg %p139
        $region83: #{conv_block_forward.2} parent=64 // pred_check_branch
          %356 = sbr.rel (%p354) target = $region85
        $region84: #{conv_block_forward.2} parent=64 // pred_region
          _
        $region85: #{conv_block_forward.2} parent=64 // pred_fallthru
          _
        // Predicated region
        $region86: #{conv_block_forward.2} parent=64 // pred_check
          %p357 = pneg %p118
        $region87: #{conv_block_forward.2} parent=64 // pred_check_branch
          %359 = sbr.rel (%p357) target = $region89
        $region88: #{conv_block_forward.2} parent=64 // pred_region
          _
        $region89: #{conv_block_forward.2} parent=64 // pred_fallthru
          _
        // Predicated region
        $region90: #{conv_block_forward.2} parent=64 // pred_check
          %p360 = pneg %p139
        $region91: #{conv_block_forward.2} parent=64 // pred_check_branch
          %362 = sbr.rel (%p360) target = $region93
        $region92: #{conv_block_forward.2} parent=64 // pred_region
          _
        $region93: #{conv_block_forward.2} parent=64 // pred_fallthru
          _
      $region65: #{conv_block_forward.2} parent=5 // pred_fallthru
        _
      %p363 = scmp.le.s32.totalorder 2, %s11
      // Predicated region
      $region94: #{conv_block_forward.2} parent=5 // pred_check
        %p364 = pneg %p363
      $region95: #{conv_block_forward.2} parent=5 // pred_check_branch
        %366 = sbr.rel (%p364) target = $region97
      $region96: #{conv_block_forward.2} parent=5 // pred_region
        %s367 = ssub.s32 %s11, 2
        // Predicated region
        $region98: #{conv_block_forward.2} parent=96 // pred_check
          %p368 = pneg %p103
        $region99: #{conv_block_forward.2} parent=96 // pred_check_branch
          %370 = sbr.rel (%p368) target = $region101
        $region100: #{conv_block_forward.2} parent=96 // pred_region
          %p371 = scmp.lt.s32.totalorder %s22, 1
          %s372 = scalar_select %p371, %s22, 1
          %p373 = scmp.lt.s32.totalorder %s23, 1
          %s374 = scalar_select %p373, %s23, 1
          %s375 = smul.addr %s372, 2
          %s376 = sadd.s32 %s374, %s375
          %s377 = smul.addr %s376, 4
          %s378 = scalar_lea.vmem %s2, %s377
        $region101: #{conv_block_forward.2} parent=96 // pred_fallthru
          _
      $region97: #{conv_block_forward.2} parent=5 // pred_fallthru
        _
    $region6: #{conv_block_forward.2} parent=1 // loop_footer
      %s15 = sadd.s32 1, %s11
    $region7: #{conv_block_forward.2} parent=1 // loop_footer_branch
      %10 = sbr.rel target = $region3
    $region8: #{conv_block_forward.2} parent=1 // loop_exit
      _

</llo_original>
